<compile_context>
chip_gen: v5e
topology: v5e:2x2
jax: 0.10.0
libtpu: 0.0.40
codegen_flags: <defaults>
</compile_context>

<pallas_src>
import jax
import jax.numpy as jnp
from jax.experimental import pallas as pl
from jax.experimental.pallas import tpu as pltpu


def _disc_kernel(x_ref, w1t_ref, b1_ref, w2t_ref, b2_ref, out_ref):
    """Full forward pass for one batch tile.

    x_ref  : (TB, E)  input tile, caller's dtype (f32 or bf16)
    w1t_ref: (E, H)   first linear weight, pre-transposed (matches x dtype)
    b1_ref : (1, H)   first linear bias, f32
    w2t_ref: (H, 1)   second linear weight, pre-transposed, f32
    b2_ref : (1,)     second linear bias, f32 scalar in SMEM
    out_ref: (TB, 1)  sigmoid output, f32
    """
    # Layer 1 on the MXU, f32 accumulation: (TB, E) @ (E, H) -> (TB, H).
    h = jnp.dot(x_ref[...], w1t_ref[...], preferred_element_type=jnp.float32)
    # Bias + ReLU in f32 on the VPU (valid on v5e, which has no bf16 VPU path).
    h = jnp.maximum(h + b1_ref[...], 0.0)
    # Layer 2: (TB, H) @ (H, 1) -> (TB, 1); scalar bias read from SMEM.
    logits = jnp.dot(h, w2t_ref[...], preferred_element_type=jnp.float32)
    logits = logits + b2_ref[0]
    # Exact sigmoid; exp/divide route to the EUP slot (free at this roofline).
    out_ref[...] = (1.0 / (1.0 + jnp.exp(-logits))).astype(out_ref.dtype)


def _pick_tb(B, E, x_itemsize, *, vmem_budget_bytes=20 << 20, x_buffers=2):
    """Batch-tile size derived from a VMEM byte budget (not a fixed row cap).

    Per-row VMEM cost:
      * `x_buffers` pipelined x rows .............. x_buffers * E * x_itemsize
      * (tb, H) f32 hidden, lane-padded to 128 .... 512
      * 2 pipelined (tb, 1) f32 out, lane-padded .. 1024
    """
    per_row = x_buffers * E * x_itemsize + 128 * 4 + 2 * 128 * 4
    tb = max(128, (vmem_budget_bytes // per_row) // 128 * 128)
    # v7x megacore: large batches should produce >= 8 (at least >= 2) grid
    # steps so the "parallel" axis actually shards across the 2 TensorCores.
    if B >= 8 * 128:
        tb = min(tb, max(128, (B // 8) // 128 * 128))
    elif B >= 2 * 128:
        tb = min(tb, max(128, (B // 2) // 128 * 128))
    if tb >= B:
        return B  # small batch: one full-array block (block dims == array dims)
    return tb


def discriminator_forward(x, w1, b1, w2, b2, *, tb=None, x_buffers=2):
    """x: (B, E).  w1: (H, E), b1: (H,), w2: (O, H), b2: (O,) — PyTorch
    nn.Linear parameter shapes (H=10, O=1).  Returns (B, O) float32.

    x is read in the caller's dtype (f32 or bf16) — no extra cast pass over x.
    """
    B, E = x.shape
    H = w1.shape[0]  # 10
    O = w2.shape[0]  # 1
    assert w1.shape == (H, E) and b1.shape == (H,)
    assert w2.shape == (O, H) and b2.shape == (O,)
    assert O == 1

    x_itemsize = jnp.dtype(x.dtype).itemsize
    if tb is None:
        tb = _pick_tb(B, E, x_itemsize, x_buffers=x_buffers)
    assert tb == B or tb % 128 == 0, "tb must be a multiple of 128 (or == B)"

    # Tiny trace-time parameter casts/transposes (weights are (10, E) / (1, 10);
    # nothing here touches x, so no extra HBM pass over the activations).
    w1t = w1.astype(x.dtype).T                               # (E, H)
    b1r = b1.astype(jnp.float32).reshape(1, H)               # (1, H)
    w2t = w2.astype(jnp.float32).T                           # (H, O)
    b2r = b2.astype(jnp.float32).reshape(O)                  # (1,) -> SMEM scalar

    grid = (pl.cdiv(B, tb),)  # non-divisible B: masked partial last block

    # VMEM from actual buffer sizes (+ headroom), clamped under v7x's 64 MiB.
    x_tile_bytes = tb * E * x_itemsize
    h_tile_bytes = tb * 128 * 4        # (tb, H) f32, lane-padded to 128
    out_tile_bytes = tb * 128 * 4      # (tb, 1) f32, lane-padded to 128
    vmem_bytes = (x_buffers * x_tile_bytes + h_tile_bytes
                  + 2 * out_tile_bytes + (4 << 20))
    vmem_bytes = int(min(max(vmem_bytes, 8 << 20), 64 << 20))

    # x pipelining depth: default double buffering; raise to 3 (x_buffers=3)
    # only if profiling shows exposed DMA on this very low-FLOP/elem kernel.
    x_spec_kwargs = {}
    if x_buffers != 2:
        x_spec_kwargs["pipeline_mode"] = pl.Buffered(x_buffers)

    out = pl.pallas_call(
        _disc_kernel,
        out_shape=jax.ShapeDtypeStruct((B, O), jnp.float32),
        grid=grid,
        in_specs=[
            pl.BlockSpec((tb, E), lambda i: (i, 0), **x_spec_kwargs),  # x tile
            pl.BlockSpec((E, H), lambda i: (0, 0)),                    # w1^T
            pl.BlockSpec((1, H), lambda i: (0, 0)),                    # b1
            pl.BlockSpec((H, O), lambda i: (0, 0)),                    # w2^T
            pl.BlockSpec(memory_space=pltpu.MemorySpace.SMEM),         # b2 scalar
        ],
        out_specs=pl.BlockSpec((tb, O), lambda i: (i, 0)),
        compiler_params=pltpu.CompilerParams(
            dimension_semantics=("parallel",),   # megacore-shardable on v7x
            vmem_limit_bytes=vmem_bytes,
        ),
        cost_estimate=pl.CostEstimate(
            flops=2 * B * E * H + 2 * B * H * O,
            transcendentals=B * O,
            bytes_accessed=(B * E * x_itemsize
                            + (E * H + H + H * O + O) * 4
                            + B * O * 4),
        ),
    )(x, w1t, b1r, w2t, b2r)
    return out


def _reference(x, w1, b1, w2, b2):
    h = jnp.maximum(x @ w1.T + b1, 0.0)
    return 1.0 / (1.0 + jnp.exp(-(h @ w2.T + b2)))


if __name__ == "__main__":
    key = jax.random.PRNGKey(0)
    B, EMB_DIM, HID, OUT = 8, 32, 10, 1

    kx, k1, k2, k3, k4 = jax.random.split(key, 5)
    x = jax.random.normal(kx, (B, EMB_DIM), dtype=jnp.float32)

    # PyTorch nn.Linear parameter shapes: (out_features, in_features).
    w1 = jax.random.normal(k1, (HID, EMB_DIM), dtype=jnp.float32) * 0.1
    b1 = jax.random.normal(k2, (HID,), dtype=jnp.float32) * 0.1
    w2 = jax.random.normal(k3, (OUT, HID), dtype=jnp.float32) * 0.1
    b2 = jax.random.normal(k4, (OUT,), dtype=jnp.float32) * 0.1

    ref = _reference(x, w1, b1, w2, b2)

    # f32 path: the kernel reads x exactly as provided (no wrapper cast pass).
    out_f32 = jax.block_until_ready(discriminator_forward(x, w1, b1, w2, b2))
    assert out_f32.shape == (B, OUT), out_f32.shape
    assert jnp.allclose(out_f32, ref, atol=2e-3, rtol=2e-3), "f32 mismatch vs reference"

    # bf16-producer path: the *caller* supplies bf16 activations (halves the
    # dominant HBM read); the kernel itself never adds a cast pass over x.
    out_bf16 = jax.block_until_ready(
        discriminator_forward(x.astype(jnp.bfloat16), w1, b1, w2, b2))
    assert out_bf16.shape == (B, OUT), out_bf16.shape
    assert jnp.allclose(out_bf16, ref, atol=3e-2, rtol=3e-2), "bf16 mismatch vs reference"

    print("KERNEL_OK")
</pallas_src>

<mosaic_0001>
module attributes {stable_mosaic.version = 11 : i64} {
  func.func @_disc_kernel(%arg0: i32, %arg1: memref<8x32xf32, #tpu.memory_space<vmem>>, %arg2: memref<32x10xf32, #tpu.memory_space<vmem>>, %arg3: memref<1x10xf32, #tpu.memory_space<vmem>>, %arg4: memref<10x1xf32, #tpu.memory_space<vmem>>, %arg5: memref<1xf32, #tpu.memory_space<smem>>, %arg6: memref<8x1xf32, #tpu.memory_space<vmem>>) attributes {dimension_semantics = [#tpu.dimension_semantics<parallel>], iteration_bounds = array<i64: 1>, scalar_prefetch = 0 : i64, scratch_operands = 0 : i64, tpu.core_type = #tpu.core_type<tc>, window_params = [{transform_indices = @transform_0, window_bounds = array<i64: 8, 32>}, {pipeline_mode = #tpu.pipeline_mode<synchronous>, transform_indices = @transform_1, window_bounds = array<i64: 32, 10>}, {pipeline_mode = #tpu.pipeline_mode<synchronous>, transform_indices = @transform_2, window_bounds = array<i64: 1, 10>}, {pipeline_mode = #tpu.pipeline_mode<synchronous>, transform_indices = @transform_3, window_bounds = array<i64: 10, 1>}, {transform_indices = @transform_4, window_bounds = array<i64: 1>}, {transform_indices = @transform_5, window_bounds = array<i64: 8, 1>}]} {
    %c0 = arith.constant 0 : index
    %c0_0 = arith.constant 0 : index
    %0 = vector.load %arg1[%c0, %c0_0] : memref<8x32xf32, #tpu.memory_space<vmem>>, vector<8x32xf32>
    %c0_1 = arith.constant 0 : index
    %c0_2 = arith.constant 0 : index
    %1 = vector.load %arg2[%c0_1, %c0_2] : memref<32x10xf32, #tpu.memory_space<vmem>>, vector<32x10xf32>
    %cst = arith.constant dense<0.000000e+00> : vector<8x10xf32>
    %2 = tpu.matmul %0, %1, %cst {dimension_numbers = #tpu.dot_dimension_numbers<[1], [0], [0], [1], [0, 0, 1, 1], [], []>} : vector<8x32xf32>, vector<32x10xf32>, vector<8x10xf32> -> vector<8x10xf32>
    %c0_3 = arith.constant 0 : index
    %c0_4 = arith.constant 0 : index
    %3 = vector.load %arg3[%c0_3, %c0_4] : memref<1x10xf32, #tpu.memory_space<vmem>>, vector<1x10xf32>
    %4 = vector.broadcast %3 : vector<1x10xf32> to vector<8x10xf32>
    %5 = arith.addf %2, %4 : vector<8x10xf32>
    %cst_5 = arith.constant 0.000000e+00 : f32
    %6 = vector.broadcast %cst_5 : f32 to vector<8x10xf32>
    %7 = arith.maximumf %5, %6 : vector<8x10xf32>
    %c0_6 = arith.constant 0 : index
    %c0_7 = arith.constant 0 : index
    %8 = vector.load %arg4[%c0_6, %c0_7] : memref<10x1xf32, #tpu.memory_space<vmem>>, vector<10x1xf32>
    %cst_8 = arith.constant dense<0.000000e+00> : vector<8x1xf32>
    %9 = tpu.matmul %7, %8, %cst_8 {dimension_numbers = #tpu.dot_dimension_numbers<[1], [0], [0], [1], [0, 0, 1, 1], [], []>} : vector<8x10xf32>, vector<10x1xf32>, vector<8x1xf32> -> vector<8x1xf32>
    %c0_9 = arith.constant 0 : index
    %10 = memref.load %arg5[%c0_9] : memref<1xf32, #tpu.memory_space<smem>>
    %11 = vector.broadcast %10 : f32 to vector<8x1xf32>
    %12 = arith.addf %9, %11 : vector<8x1xf32>
    %cst_10 = arith.constant 0.000000e+00 : f32
    %13 = vector.broadcast %cst_10 : f32 to vector<8x1xf32>
    %14 = arith.subf %13, %12 : vector<8x1xf32>
    %15 = math.exp %14 : vector<8x1xf32>
    %cst_11 = arith.constant 1.000000e+00 : f32
    %16 = vector.broadcast %cst_11 : f32 to vector<8x1xf32>
    %17 = arith.addf %16, %15 : vector<8x1xf32>
    %cst_12 = arith.constant 1.000000e+00 : f32
    %18 = vector.broadcast %cst_12 : f32 to vector<8x1xf32>
    %19 = arith.divf %18, %17 : vector<8x1xf32>
    %c0_13 = arith.constant 0 : index
    %c0_14 = arith.constant 0 : index
    %20 = vector.load %arg6[%c0_13, %c0_14] : memref<8x1xf32, #tpu.memory_space<vmem>>, vector<8x1xf32>
    tpu.vector_store %arg6[%c0_13, %c0_14], %19 {strides = array<i32>} : memref<8x1xf32, #tpu.memory_space<vmem>>, vector<8x1xf32>,
    return
  }
  func.func @transform_0(%arg0: i32) -> (i32, i32) {
    %c0_i32 = arith.constant 0 : i32
    %c0_i32_0 = arith.constant 0 : i32
    return %arg0, %c0_i32 : i32, i32
  }
  func.func @transform_1(%arg0: i32) -> (i32, i32) {
    %c0_i32 = arith.constant 0 : i32
    %c0_i32_0 = arith.constant 0 : i32
    %c0_i32_1 = arith.constant 0 : i32
    return %c0_i32, %c0_i32_0 : i32, i32
  }
  func.func @transform_2(%arg0: i32) -> (i32, i32) {
    %c0_i32 = arith.constant 0 : i32
    %c0_i32_0 = arith.constant 0 : i32
    %c0_i32_1 = arith.constant 0 : i32
    return %c0_i32, %c0_i32_0 : i32, i32
  }
  func.func @transform_3(%arg0: i32) -> (i32, i32) {
    %c0_i32 = arith.constant 0 : i32
    %c0_i32_0 = arith.constant 0 : i32
    %c0_i32_1 = arith.constant 0 : i32
    return %c0_i32, %c0_i32_0 : i32, i32
  }
  func.func @transform_4(%arg0: i32) -> i32 {
    %c0_i32 = arith.constant 0 : i32
    %c0_i32_0 = arith.constant 0 : i32
    return %c0_i32 : i32
  }
  func.func @transform_5(%arg0: i32) -> (i32, i32) {
    %c0_i32 = arith.constant 0 : i32
    %c0_i32_0 = arith.constant 0 : i32
    return %arg0, %c0_i32 : i32, i32
  }
}

</mosaic_0001>

<llo_original>
// kernel: tpu_custom_call.1
$region0: #{tpu_custom_call.1}
  #allocation0 [shape = 'u32[]', space=smem, size = 0x4, offset = 0x4, fixed_abs, tag = 'smem constant byte address 0x4 - core index']
  #allocation1 [shape = 'u32[72,128]{1,0:T(1,128)}', space=vmem, size = 0x9000, scoped, tag = 'internal scratch']
  #allocation2 [shape = 'f32[1]{0:T(128)S(6)}', space=smem, size = 0x200, scoped, tag = 'scoped memory for tpu_custom_call.1']
  %s0 = inlined_call_operand.vmem [shape: f32[8,32], index: 0, kind: input, shape index: {}]
  %s1 = inlined_call_operand.vmem [shape: f32[32,10], index: 1, kind: input, shape index: {}]
  %s2 = inlined_call_operand.vmem [shape: f32[1,10], index: 2, kind: input, shape index: {}]
  %s3 = inlined_call_operand.vmem [shape: f32[10,1], index: 3, kind: input, shape index: {}]
  %s4 = inlined_call_operand.<no memory space> [shape: f32[1], index: 4, kind: input, shape index: {}]
  %s5 = inlined_call_operand.vmem [shape: f32[8,1], index: 5, kind: output, shape index: {}]
  %s6 = sld [smem:[#allocation0]]
  $region30: #{tpu_custom_call.1} parent=0
    _
  %s8 = ssub.s32 1, %s6
  %s9 = scalar_select 0, %s8, %s6
  %10 = sst [smem:[#allocation2]] %s4
  // Predicated region
  $region2: #{tpu_custom_call.1} parent=0 // pred_check
    _
  $region3: #{tpu_custom_call.1} parent=0 // pred_check_branch
    %12 = sbr.rel (0) target = $region5
  $region4: #{tpu_custom_call.1} parent=0 // pred_region
    _
  $region5: #{tpu_custom_call.1} parent=0 // pred_fallthru
    _
  // Predicated region
  $region6: #{tpu_custom_call.1} parent=0 // pred_check
    _
  $region7: #{tpu_custom_call.1} parent=0 // pred_check_branch
    %14 = sbr.rel (0) target = $region9
  $region8: #{tpu_custom_call.1} parent=0 // pred_region
    _
  $region9: #{tpu_custom_call.1} parent=0 // pred_fallthru
    _
  // Predicated region
  $region10: #{tpu_custom_call.1} parent=0 // pred_check
    _
  $region11: #{tpu_custom_call.1} parent=0 // pred_check_branch
    %16 = sbr.rel (0) target = $region13
  $region12: #{tpu_custom_call.1} parent=0 // pred_region
    _
  $region13: #{tpu_custom_call.1} parent=0 // pred_fallthru
    _
  // Predicated region
  $region14: #{tpu_custom_call.1} parent=0 // pred_check
    _
  $region15: #{tpu_custom_call.1} parent=0 // pred_check_branch
    %18 = sbr.rel (0) target = $region17
  $region16: #{tpu_custom_call.1} parent=0 // pred_region
    _
  $region17: #{tpu_custom_call.1} parent=0 // pred_fallthru
    _
  // Predicated region
  $region18: #{tpu_custom_call.1} parent=0 // pred_check
    _
  $region19: #{tpu_custom_call.1} parent=0 // pred_check_branch
    %20 = sbr.rel (0) target = $region21
  $region20: #{tpu_custom_call.1} parent=0 // pred_region
    _
  $region21: #{tpu_custom_call.1} parent=0 // pred_fallthru
    _
  %v21 = vld [vmem:[%s0] sm:$0xff]
  %v22 = vld [vmem:[%s1] sm:$0xff]
  %v23 = vld [vmem:[%s1 + $0x8] sm:$0xff]
  %v24 = vld [vmem:[%s1 + $0x10] sm:$0xff]
  %v25 = vld [vmem:[%s1 + $0x18] sm:$0xff]
  %v26 = vld [vmem:[%s2] sm:$0x1]
  %v28 = vperm.slane %v26, 0
  %vm30 = vcmask 261120
  %v32 = vsel %vm30, %v21, 0
  %34 = vmatpush.msra.mxu0 0.0
  %35 = vmatpush.msra.mxu0 0.0
  %36 = vmatpush.msra.mxu0 0.0
  %37 = vmatpush.msra.mxu0 0.0
  %38 = vmatpush.msra.mxu0 0.0
  %39 = vmatpush.msra.mxu0 0.0
  %40 = vmatpush.msra.mxu0 0.0
  %41 = vmatpush.msra.mxu0 0.0
  %42 = vmatpush.msra.mxu0 0.0
  %43 = vmatpush.msra.mxu0 0.0
  %44 = vmatpush.msra.mxu0 0.0
  %45 = vmatpush.msra.mxu0 0.0
  %46 = vmatpush.msra.mxu0 %v25
  %47 = vmatpush.msra.mxu0 %v24
  %48 = vmatpush.msra.mxu0 %v23
  %49 = vmatpush.msra.mxu0 %v22
  %50 = vmatmul.f32.gmra.mxu0 %v32
  %v51 = vpop.f32.mrf.mxu0
  %v52 = vadd.f32 %v28, %v51
  %53 = vdwg.mxu0
  %v54 = vmax.f32 %v52, 0.0
  %v55 = vld [vmem:[%s3] sm:$0xff]
  %v56 = vld [vmem:[%s3 + $0x8] sm:$0x3]
  %s57 = sld [smem:[#allocation2]]
  %v58 = vstv %s57
  %vm59 = vcmask 80896
  %v61 = vsel %vm59, %v54, 0
  %vm63 = vcmask 1041408
  %v65 = vsel %vm63, %v56, 0
  %67 = vmatpush.msra.mxu0 0.0
  %68 = vmatpush.msra.mxu0 0.0
  %69 = vmatpush.msra.mxu0 0.0
  %70 = vmatpush.msra.mxu0 0.0
  %71 = vmatpush.msra.mxu0 0.0
  %72 = vmatpush.msra.mxu0 0.0
  %73 = vmatpush.msra.mxu0 0.0
  %74 = vmatpush.msra.mxu0 0.0
  %75 = vmatpush.msra.mxu0 0.0
  %76 = vmatpush.msra.mxu0 0.0
  %77 = vmatpush.msra.mxu0 0.0
  %78 = vmatpush.msra.mxu0 0.0
  %79 = vmatpush.msra.mxu0 0.0
  %80 = vmatpush.msra.mxu0 0.0
  %81 = vmatpush.msra.mxu0 %v65
  %82 = vmatpush.msra.mxu0 %v55
  %83 = vmatmul.f32.gmra.mxu0 %v61
  %v84 = vpop.f32.mrf.mxu0
  %v85 = vadd.f32 %v58, %v84
  %86 = vdwg.mxu0
  %v87 = vsub.f32 0.0, %v85
  %v88 = vmul.f32 %v87, 1.442695
  %v89 = vpow.pop %v88
  %v90 = vadd.f32 %v89, 1.0
  %v91 = vrcp.pop %v90
  %v92 = vmul.f32 %v90, %v91
  %v93 = vsub.f32 1.0, %v92
  %v94 = vmul.f32 %v91, %v93
  %v95 = vadd.f32 %v91, %v94
  %vm96 = vweird.f32 %v90
  %vm97 = vweird.f32 %v91
  %vm98 = vmor %vm96, %vm97
  %v99 = vsel %vm98, %v91, %v95
  %v100 = vand.u32 2147483647, %v90
  %vm101 = vcmp.eq.f32.partialorder %v100, 8.507059e+37
  %v102 = vand.u32 %v90, 2147483648
  %v103 = vor.u32 1.1754944e-38, %v102
  %v104 = vsel %vm101, %v103, %v99
  %v105 = vmul.f32 1.0, %v104
  %vm106 = vcmask 7168
  %107 = vst.msk [vmem:[%s5] sm:$0xff] %vm106, %v105
  // Predicated region
  $region22: #{tpu_custom_call.1} parent=0 // pred_check
    _
  $region23: #{tpu_custom_call.1} parent=0 // pred_check_branch
    %109 = sbr.rel (0) target = $region25
  $region24: #{tpu_custom_call.1} parent=0 // pred_region
    _
  $region25: #{tpu_custom_call.1} parent=0 // pred_fallthru
    _
  // Predicated region
  $region26: #{tpu_custom_call.1} parent=0 // pred_check
    _
  $region27: #{tpu_custom_call.1} parent=0 // pred_check_branch
    %111 = sbr.rel (0) target = $region29
  $region28: #{tpu_custom_call.1} parent=0 // pred_region
    _
  $region29: #{tpu_custom_call.1} parent=0 // pred_fallthru
    _

</llo_original>
